<compile_context>
chip_gen: v6e
topology: v6e:2x2x1
jax: 0.10.0
libtpu: 0.0.40
codegen_flags: <defaults>
</compile_context>

<pallas_src>
import jax
import jax.numpy as jnp
from jax.experimental import pallas as pl
from jax.experimental.pallas import tpu as pltpu


# ---------------------------------------------------------------------------
# Kernel.  Per grid step i the refs are:
#   x_ref  : (Bt, D)  f32   activation tile
#   p_ref  : (8,  D)  f32   stacked per-feature params:
#            row 0 = s1  (BN1 scale)      row 1 = t1 (BN1 shift)
#            row 2 = s2  (BN2 scale)      row 3 = t2 (BN2 shift, lin1 bias folded in)
#            row 4 = b2  (Linear2 bias)   rows 5..7 = padding
#   w1_ref : (D, D)   bf16  Linear1 weight, (in, out) layout
#   w2_ref : (D, D)   bf16  Linear2 weight, (in, out) layout
#   o_ref  : (Bt, D)  f32   output tile
# ---------------------------------------------------------------------------
def _residual_block_kernel(x_ref, p_ref, w1_ref, w2_ref, o_ref):
    x = x_ref[...].astype(jnp.float32)                               # (Bt, D)

    s1 = p_ref[0:1, :]
    t1 = p_ref[1:2, :]
    s2 = p_ref[2:3, :]
    t2 = p_ref[3:4, :]
    b2 = p_ref[4:5, :]

    # ---- BN1 (folded scale/shift) + ReLU
    h = jnp.maximum(x * s1 + t1, 0.0)

    # ---- Linear1: bf16 MXU operands, f32 accumulation (bias folded into t2)
    h = jnp.dot(h.astype(jnp.bfloat16), w1_ref[...],
                preferred_element_type=jnp.float32)

    # ---- BN2 (folded, includes lin1 bias) + ReLU;  Dropout == identity in eval
    h = jnp.maximum(h * s2 + t2, 0.0)

    # ---- Linear2 + bias
    h = jnp.dot(h.astype(jnp.bfloat16), w2_ref[...],
                preferred_element_type=jnp.float32) + b2

    # ---- residual add (f32), cast only at the store
    o_ref[...] = (h + x).astype(o_ref.dtype)


# ---------------------------------------------------------------------------
# Wrapper-side parameter folding (runs once, outside the kernel).
# Takes PyTorch-layout params (Linear weight is (out, in)) and produces the
# (8, D) f32 slab + two (in, out) bf16 weights the kernel consumes.
# ---------------------------------------------------------------------------
def fold_params(params, eps=1e-5):
    D = params["lin1_w"].shape[0]
    s1 = params["bn1_gamma"] * jax.lax.rsqrt(params["bn1_var"] + eps)
    t1 = params["bn1_beta"] - params["bn1_mean"] * s1
    s2 = params["bn2_gamma"] * jax.lax.rsqrt(params["bn2_var"] + eps)
    # BN2 sees (dot1 + bl1):  BN2(h) = dot1*s2 + (bl1 - m2)*s2 + beta2
    t2 = params["bn2_beta"] + (params["lin1_b"] - params["bn2_mean"]) * s2
    b2 = params["lin2_b"]

    slab = jnp.zeros((8, D), jnp.float32)
    slab = slab.at[0].set(s1).at[1].set(t1).at[2].set(s2).at[3].set(t2).at[4].set(b2)

    w1 = params["lin1_w"].T.astype(jnp.bfloat16)   # (in, out)
    w2 = params["lin2_w"].T.astype(jnp.bfloat16)   # (in, out)
    return slab, w1, w2


def _choose_batch_tile(N, requested):
    """Largest multiple-of-8 divisor of N that is <= requested; halved if needed so
    the grid has >= 2 steps (v7x megacore) when N allows it."""
    bt = min(requested, N)
    bt = max(8, (bt // 8) * 8)
    while N % bt:
        bt -= 8
    if N // bt < 2:
        half = (N // 2) // 8 * 8
        if half >= 8 and N % half == 0:
            bt = half
    return bt


def residual_block(x, params, *, batch_tile=512, eps=1e-5):
    """x: (N, D) float32.  Returns (N, D) float32.  Eval-mode semantics."""
    N, D = x.shape
    assert N % 8 == 0, "batch must be a multiple of 8 (sublane alignment)"
    bt = _choose_batch_tile(N, batch_tile)
    grid = (N // bt,)

    slab, w1, w2 = fold_params(params, eps)

    return pl.pallas_call(
        _residual_block_kernel,
        out_shape=jax.ShapeDtypeStruct((N, D), jnp.float32),
        grid_spec=pl.GridSpec(
            grid=grid,
            in_specs=[
                pl.BlockSpec((bt, D), lambda i: (i, 0)),   # x tile
                pl.BlockSpec((8, D),  lambda i: (0, 0)),   # stacked per-feature params
                pl.BlockSpec((D, D),  lambda i: (0, 0)),   # w1
                pl.BlockSpec((D, D),  lambda i: (0, 0)),   # w2
            ],
            out_specs=pl.BlockSpec((bt, D), lambda i: (i, 0)),
        ),
        compiler_params=pltpu.CompilerParams(
            dimension_semantics=("parallel",)),
    )(x, slab, w1, w2)


# ---------------------------------------------------------------------------
# Pure-JAX reference (original module math; weights rounded through bf16 to
# match their storage precision in the kernel) — correctness check only.
# ---------------------------------------------------------------------------
def residual_block_ref(x, params, eps=1e-5):
    def bn(h, pfx):
        return ((h - params[pfx + "_mean"]) * params[pfx + "_gamma"]
                / jnp.sqrt(params[pfx + "_var"] + eps) + params[pfx + "_beta"])

    w1 = params["lin1_w"].astype(jnp.bfloat16).astype(jnp.float32)
    w2 = params["lin2_w"].astype(jnp.bfloat16).astype(jnp.float32)

    h = jnp.maximum(bn(x, "bn1"), 0.0)
    h = h @ w1.T + params["lin1_b"]
    h = jnp.maximum(bn(h, "bn2"), 0.0)
    # Dropout is the identity in eval mode.
    h = h @ w2.T + params["lin2_b"]
    return h + x


def make_params(key, hidden_dim):
    D = hidden_dim
    f32 = jnp.float32
    ks = jax.random.split(key, 12)
    scale = 0.05
    return {
        # BatchNorm1
        "bn1_gamma": 1.0 + 0.1 * jax.random.normal(ks[0], (D,), f32),
        "bn1_beta":  0.1 * jax.random.normal(ks[1], (D,), f32),
        "bn1_mean":  0.1 * jax.random.normal(ks[2], (D,), f32),
        "bn1_var":   jax.random.uniform(ks[3], (D,), f32, 0.5, 1.5),
        # Linear1 (PyTorch layout: (out, in))
        "lin1_w":    scale * jax.random.normal(ks[4], (D, D), f32),
        "lin1_b":    scale * jax.random.normal(ks[5], (D,), f32),
        # BatchNorm2
        "bn2_gamma": 1.0 + 0.1 * jax.random.normal(ks[6], (D,), f32),
        "bn2_beta":  0.1 * jax.random.normal(ks[7], (D,), f32),
        "bn2_mean":  0.1 * jax.random.normal(ks[8], (D,), f32),
        "bn2_var":   jax.random.uniform(ks[9], (D,), f32, 0.5, 1.5),
        # Linear2
        "lin2_w":    scale * jax.random.normal(ks[10], (D, D), f32),
        "lin2_b":    scale * jax.random.normal(ks[11], (D,), f32),
    }


if __name__ == "__main__":
    # Small, TPU-friendly shapes: hidden_dim D=128 (lane-dense), batch N=64.
    # The tile chooser caps batch_tile (default 512) to 32 rows here so the grid
    # still has 2 parallel steps for v7x's two TensorCores.
    N, D = 64, 128
    key = jax.random.PRNGKey(0)
    kx, kp = jax.random.split(key)
    x = jax.random.normal(kx, (N, D), jnp.float32)
    params = make_params(kp, D)

    out = jax.block_until_ready(residual_block(x, params))

    ref = residual_block_ref(x, params)
    assert out.shape == (N, D) and out.dtype == jnp.float32
    assert jnp.allclose(out, ref, atol=2e-2, rtol=2e-2), \
        "mismatch vs pure-JAX reference"

    print("KERNEL_OK")
</pallas_src>

<mosaic_0001>
module attributes {stable_mosaic.version = 11 : i64} {
  func.func @_residual_block_kernel(%arg0: i32, %arg1: memref<32x128xf32, #tpu.memory_space<vmem>>, %arg2: memref<8x128xf32, #tpu.memory_space<vmem>>, %arg3: memref<128x128xbf16, #tpu.memory_space<vmem>>, %arg4: memref<128x128xbf16, #tpu.memory_space<vmem>>, %arg5: memref<32x128xf32, #tpu.memory_space<vmem>>) attributes {dimension_semantics = [#tpu.dimension_semantics<parallel>], iteration_bounds = array<i64: 2>, scalar_prefetch = 0 : i64, scratch_operands = 0 : i64, tpu.core_type = #tpu.core_type<tc>, window_params = [{transform_indices = @transform_0, window_bounds = array<i64: 32, 128>}, {pipeline_mode = #tpu.pipeline_mode<synchronous>, transform_indices = @transform_1, window_bounds = array<i64: 8, 128>}, {pipeline_mode = #tpu.pipeline_mode<synchronous>, transform_indices = @transform_2, window_bounds = array<i64: 128, 128>}, {pipeline_mode = #tpu.pipeline_mode<synchronous>, transform_indices = @transform_3, window_bounds = array<i64: 128, 128>}, {transform_indices = @transform_4, window_bounds = array<i64: 32, 128>}]} {
    %c0 = arith.constant 0 : index
    %c0_0 = arith.constant 0 : index
    %0 = vector.load %arg1[%c0, %c0_0] : memref<32x128xf32, #tpu.memory_space<vmem>>, vector<32x128xf32>
    %c0_1 = arith.constant 0 : index
    %c0_2 = arith.constant 0 : index
    %1 = vector.load %arg2[%c0_1, %c0_2] : memref<8x128xf32, #tpu.memory_space<vmem>>, vector<1x128xf32>
    %c1 = arith.constant 1 : index
    %c0_3 = arith.constant 0 : index
    %2 = vector.load %arg2[%c1, %c0_3] : memref<8x128xf32, #tpu.memory_space<vmem>>, vector<1x128xf32>
    %c2 = arith.constant 2 : index
    %c0_4 = arith.constant 0 : index
    %3 = vector.load %arg2[%c2, %c0_4] : memref<8x128xf32, #tpu.memory_space<vmem>>, vector<1x128xf32>
    %c3 = arith.constant 3 : index
    %c0_5 = arith.constant 0 : index
    %4 = vector.load %arg2[%c3, %c0_5] : memref<8x128xf32, #tpu.memory_space<vmem>>, vector<1x128xf32>
    %c4 = arith.constant 4 : index
    %c0_6 = arith.constant 0 : index
    %5 = vector.load %arg2[%c4, %c0_6] : memref<8x128xf32, #tpu.memory_space<vmem>>, vector<1x128xf32>
    %6 = vector.broadcast %1 : vector<1x128xf32> to vector<32x128xf32>
    %7 = arith.mulf %0, %6 : vector<32x128xf32>
    %8 = vector.broadcast %2 : vector<1x128xf32> to vector<32x128xf32>
    %9 = arith.addf %7, %8 : vector<32x128xf32>
    %cst = arith.constant 0.000000e+00 : f32
    %10 = vector.broadcast %cst : f32 to vector<32x128xf32>
    %11 = arith.maximumf %9, %10 : vector<32x128xf32>
    %12 = arith.truncf %11 : vector<32x128xf32> to vector<32x128xbf16>
    %c0_7 = arith.constant 0 : index
    %c0_8 = arith.constant 0 : index
    %13 = vector.load %arg3[%c0_7, %c0_8] : memref<128x128xbf16, #tpu.memory_space<vmem>>, vector<128x128xbf16>
    %cst_9 = arith.constant dense<0.000000e+00> : vector<32x128xf32>
    %14 = tpu.matmul %12, %13, %cst_9 {dimension_numbers = #tpu.dot_dimension_numbers<[1], [0], [0], [1], [0, 0, 1, 1], [], []>} : vector<32x128xbf16>, vector<128x128xbf16>, vector<32x128xf32> -> vector<32x128xf32>
    %15 = vector.broadcast %3 : vector<1x128xf32> to vector<32x128xf32>
    %16 = arith.mulf %14, %15 : vector<32x128xf32>
    %17 = vector.broadcast %4 : vector<1x128xf32> to vector<32x128xf32>
    %18 = arith.addf %16, %17 : vector<32x128xf32>
    %cst_10 = arith.constant 0.000000e+00 : f32
    %19 = vector.broadcast %cst_10 : f32 to vector<32x128xf32>
    %20 = arith.maximumf %18, %19 : vector<32x128xf32>
    %21 = arith.truncf %20 : vector<32x128xf32> to vector<32x128xbf16>
    %c0_11 = arith.constant 0 : index
    %c0_12 = arith.constant 0 : index
    %22 = vector.load %arg4[%c0_11, %c0_12] : memref<128x128xbf16, #tpu.memory_space<vmem>>, vector<128x128xbf16>
    %cst_13 = arith.constant dense<0.000000e+00> : vector<32x128xf32>
    %23 = tpu.matmul %21, %22, %cst_13 {dimension_numbers = #tpu.dot_dimension_numbers<[1], [0], [0], [1], [0, 0, 1, 1], [], []>} : vector<32x128xbf16>, vector<128x128xbf16>, vector<32x128xf32> -> vector<32x128xf32>
    %24 = vector.broadcast %5 : vector<1x128xf32> to vector<32x128xf32>
    %25 = arith.addf %23, %24 : vector<32x128xf32>
    %26 = arith.addf %25, %0 : vector<32x128xf32>
    %c0_14 = arith.constant 0 : index
    %c0_15 = arith.constant 0 : index
    %27 = vector.load %arg5[%c0_14, %c0_15] : memref<32x128xf32, #tpu.memory_space<vmem>>, vector<32x128xf32>
    tpu.vector_store %arg5[%c0_14, %c0_15], %26 {strides = array<i32>} : memref<32x128xf32, #tpu.memory_space<vmem>>, vector<32x128xf32>,
    return
  }
  func.func @transform_0(%arg0: i32) -> (i32, i32) {
    %c0_i32 = arith.constant 0 : i32
    %c0_i32_0 = arith.constant 0 : i32
    return %arg0, %c0_i32 : i32, i32
  }
  func.func @transform_1(%arg0: i32) -> (i32, i32) {
    %c0_i32 = arith.constant 0 : i32
    %c0_i32_0 = arith.constant 0 : i32
    %c0_i32_1 = arith.constant 0 : i32
    return %c0_i32, %c0_i32_0 : i32, i32
  }
  func.func @transform_2(%arg0: i32) -> (i32, i32) {
    %c0_i32 = arith.constant 0 : i32
    %c0_i32_0 = arith.constant 0 : i32
    %c0_i32_1 = arith.constant 0 : i32
    return %c0_i32, %c0_i32_0 : i32, i32
  }
  func.func @transform_3(%arg0: i32) -> (i32, i32) {
    %c0_i32 = arith.constant 0 : i32
    %c0_i32_0 = arith.constant 0 : i32
    %c0_i32_1 = arith.constant 0 : i32
    return %c0_i32, %c0_i32_0 : i32, i32
  }
  func.func @transform_4(%arg0: i32) -> (i32, i32) {
    %c0_i32 = arith.constant 0 : i32
    %c0_i32_0 = arith.constant 0 : i32
    return %arg0, %c0_i32 : i32, i32
  }
}

</mosaic_0001>

<llo_original>
// kernel: tpu_custom_call.1
$region0: #{tpu_custom_call.1}
  #allocation0 [shape = 'u32[]', space=smem, size = 0x4, offset = 0x4, fixed_abs, tag = 'smem constant byte address 0x4 - core index']
  #allocation1 [shape = 'u32[144,128]{1,0:T(1,128)}', space=vmem, size = 0x12000, scoped, tag = 'internal scratch']
  %s0 = inlined_call_operand.hbm [shape: f32[64,128], index: 0, kind: input, shape index: {}]
  %s1 = inlined_call_operand.hbm [shape: f32[8,128], index: 1, kind: input, shape index: {}]
  %s2 = inlined_call_operand.hbm [shape: bf16[128,128], index: 2, kind: input, shape index: {}]
  %s3 = inlined_call_operand.hbm [shape: bf16[128,128], index: 3, kind: input, shape index: {}]
  %s4 = inlined_call_operand.hbm [shape: f32[64,128], index: 4, kind: output, shape index: {}]
  %s5 = sld [smem:[#allocation0]]
  $region65: #{tpu_custom_call.1} parent=0
    _
  %s7 = ssub.s32 1, %s5
  %s8 = scalar_select 0, %s7, %s5
  $region1: #{tpu_custom_call.1} parent=0
    #allocation2 [shape = 'u8[32768]{0}', space=vmem, size = 0x8000, scoped, tag = 'input window, operand 0']
    #allocation3 [shape = 's32[2]{0}', space=sflag, size = 0x8, scoped, tag = 'scoped memory for tpu_custom_call.1']
    #allocation4 [shape = 's32[2]{0}', space=sflag, size = 0x8, scoped, tag = 'scoped memory for tpu_custom_call.1']
    #allocation5 [shape = 'u8[4096]{0}', space=vmem, size = 0x1000, scoped, tag = 'input window, operand 1, single buffered']
    #allocation6 [shape = 's32[1]{0}', space=sflag, size = 0x4, scoped, tag = 'scoped memory for tpu_custom_call.1']
    #allocation7 [shape = 'u8[32768]{0}', space=vmem, size = 0x8000, scoped, tag = 'input window, operand 2, single buffered']
    #allocation8 [shape = 'u8[32768]{0}', space=vmem, size = 0x8000, scoped, tag = 'input window, operand 3, single buffered']
    #allocation9 [shape = 's32[1]{0}', space=sflag, size = 0x4, scoped, tag = 'scoped memory for tpu_custom_call.1']
    #allocation10 [shape = 'u8[32768]{0}', space=vmem, size = 0x8000, scoped, tag = 'output window, operand 0']
    %9 = vsyncpa [#allocation3], 0
    %s10 = scalar_lea.sflag [#allocation3], 1
    %11 = vsyncpa %s10, 0
    %12 = vsyncpa [#allocation6], 0
    %13 = vsyncpa [#allocation9], 0
    %14 = vsyncpa [#allocation4], 0
    %s15 = scalar_lea.sflag [#allocation4], 1
    %16 = vsyncpa %s15, 0
    loop: start=0, step=1, limit=4
    $region2: #{tpu_custom_call.1} parent=1 // loop_pre_header
      _
    $region3: #{tpu_custom_call.1} parent=1 // loop_header
      %s18 = sphi 0, %s22
      %p19 = scmp.ge.s32.totalorder %s18, 4
      %s28 = sphi 0, %s30
      %s31 = sphi 0, %s28
      %s32 = sphi 0, %s31
      %s48 = sphi 0, %s32
      %s52 = sphi 0, %s52
      %s54 = sphi 0, %s52
      %s55 = sphi 0, %s54
      %s69 = sphi 0, %s55
      %s73 = sphi 0, %s73
      %s75 = sphi 0, %s73
      %s76 = sphi 0, %s75
      %s90 = sphi 0, %s76
      %s94 = sphi 0, %s94
      %s96 = sphi 0, %s94
      %s97 = sphi 0, %s96
      %s111 = sphi 0, %s97
      %s117 = sphi 0, %s119
      %s120 = sphi 0, %s117
      %s121 = sphi 0, %s120
      %s137 = sphi 0, %s121
    $region4: #{tpu_custom_call.1} parent=1 // loop_header_branch
      %21 = sbr.rel (%p19) target = $region8
    $region5: #{tpu_custom_call.1} parent=1 // loop_body
      %s23 = ssub.s32 %s18, 1
      %s24 = ssub.s32 %s18, 2
      %s25 = sadd.s32 %s18, 1
      %s26 = ssub.s32 %s18, %s25
      %p27 = scmp.eq.s32.totalorder %s26, 0
      %s29 = sadd.s32 %s28, 1
      %s30 = scalar_select %p27, %s28, %s29
      %p33 = pneg %p27
      %p34 = scmp.eq.s32.totalorder %s18, 1
      %p35 = por %p33, %p34
      %p36 = scmp.ne.s32.totalorder %s28, %s31
      %p37 = scmp.eq.s32.totalorder %s18, 0
      %p38 = por %p36, %p37
      %p39 = scmp.ne.s32.totalorder %s28, %s31
      %p40 = scmp.eq.s32.totalorder %s23, 1
      %p41 = por %p39, %p40
      %p42 = scmp.ne.s32.totalorder %s31, %s32
      %p43 = scmp.eq.s32.totalorder %s23, 0
      %p44 = por %p42, %p43
      %p45 = scmp.ne.s32.totalorder %s31, %s32
      %p46 = scmp.eq.s32.totalorder %s24, 1
      %p47 = por %p45, %p46
      %p49 = scmp.ne.s32.totalorder %s32, %s48
      %p50 = scmp.eq.s32.totalorder %s24, 0
      %p51 = por %p49, %p50
      %s53 = sadd.s32 %s52, 1
      %p56 = scmp.eq.s32.totalorder %s18, 1
      %p57 = scmp.ne.s32.totalorder %s52, %s54
      %p58 = scmp.eq.s32.totalorder %s18, 0
      %p59 = por %p57, %p58
      %p60 = scmp.ne.s32.totalorder %s52, %s54
      %p61 = scmp.eq.s32.totalorder %s23, 1
      %p62 = por %p60, %p61
      %p63 = scmp.ne.s32.totalorder %s54, %s55
      %p64 = scmp.eq.s32.totalorder %s23, 0
      %p65 = por %p63, %p64
      %p66 = scmp.ne.s32.totalorder %s54, %s55
      %p67 = scmp.eq.s32.totalorder %s24, 1
      %p68 = por %p66, %p67
      %p70 = scmp.ne.s32.totalorder %s55, %s69
      %p71 = scmp.eq.s32.totalorder %s24, 0
      %p72 = por %p70, %p71
      %s74 = sadd.s32 %s73, 1
      %p77 = scmp.eq.s32.totalorder %s18, 1
      %p78 = scmp.ne.s32.totalorder %s73, %s75
      %p79 = scmp.eq.s32.totalorder %s18, 0
      %p80 = por %p78, %p79
      %p81 = scmp.ne.s32.totalorder %s73, %s75
      %p82 = scmp.eq.s32.totalorder %s23, 1
      %p83 = por %p81, %p82
      %p84 = scmp.ne.s32.totalorder %s75, %s76
      %p85 = scmp.eq.s32.totalorder %s23, 0
      %p86 = por %p84, %p85
      %p87 = scmp.ne.s32.totalorder %s75, %s76
      %p88 = scmp.eq.s32.totalorder %s24, 1
      %p89 = por %p87, %p88
      %p91 = scmp.ne.s32.totalorder %s76, %s90
      %p92 = scmp.eq.s32.totalorder %s24, 0
      %p93 = por %p91, %p92
      %s95 = sadd.s32 %s94, 1
      %p98 = scmp.eq.s32.totalorder %s18, 1
      %p99 = scmp.ne.s32.totalorder %s94, %s96
      %p100 = scmp.eq.s32.totalorder %s18, 0
      %p101 = por %p99, %p100
      %p102 = scmp.ne.s32.totalorder %s94, %s96
      %p103 = scmp.eq.s32.totalorder %s23, 1
      %p104 = por %p102, %p103
      %p105 = scmp.ne.s32.totalorder %s96, %s97
      %p106 = scmp.eq.s32.totalorder %s23, 0
      %p107 = por %p105, %p106
      %p108 = scmp.ne.s32.totalorder %s96, %s97
      %p109 = scmp.eq.s32.totalorder %s24, 1
      %p110 = por %p108, %p109
      %p112 = scmp.ne.s32.totalorder %s97, %s111
      %p113 = scmp.eq.s32.totalorder %s24, 0
      %p114 = por %p112, %p113
      %s115 = ssub.s32 %s18, %s25
      %p116 = scmp.eq.s32.totalorder %s115, 0
      %s118 = sadd.s32 %s117, 1
      %s119 = scalar_select %p116, %s117, %s118
      %p122 = pneg %p116
      %p123 = scmp.eq.s32.totalorder %s18, 1
      %p124 = por %p122, %p123
      %p125 = scmp.ne.s32.totalorder %s117, %s120
      %p126 = scmp.eq.s32.totalorder %s18, 0
      %p127 = por %p125, %p126
      %p128 = scmp.ne.s32.totalorder %s117, %s120
      %p129 = scmp.eq.s32.totalorder %s23, 1
      %p130 = por %p128, %p129
      %p131 = scmp.ne.s32.totalorder %s120, %s121
      %p132 = scmp.eq.s32.totalorder %s23, 0
      %p133 = por %p131, %p132
      %p134 = scmp.ne.s32.totalorder %s120, %s121
      %p135 = scmp.eq.s32.totalorder %s24, 1
      %p136 = por %p134, %p135
      %p138 = scmp.ne.s32.totalorder %s121, %s137
      %p139 = scmp.eq.s32.totalorder %s24, 0
      %p140 = por %p138, %p139
      %p141 = scmp.le.s32.totalorder 1, %s18
      %p142 = scmp.lt.s32.totalorder %s18, 3
      %p143 = pnand %p141, %p142
      %p144 = pneg %p143
      // Predicated region
      $region9: #{tpu_custom_call.1} parent=5 // pred_check
        _
      $region10: #{tpu_custom_call.1} parent=5 // pred_check_branch
        %146 = sbr.rel (%p143) target = $region12
      $region11: #{tpu_custom_call.1} parent=5 // pred_region
        %s147 = ssub.s32 %s18, 1
        // Predicated region
        $region13: #{tpu_custom_call.1} parent=11 // pred_check
          %p148 = pneg %p65
        $region14: #{tpu_custom_call.1} parent=11 // pred_check_branch
          %150 = sbr.rel (%p148) target = $region16
        $region15: #{tpu_custom_call.1} parent=11 // pred_region
          %s152 = ssub.s32 128, 128
          %153 = vsyncadd [#allocation6], %s152
          %s155 = sshll.u32 [#allocation5], 4
          %s156 = int_to_ptr.vmem [resolvable:$true] %s155
          %158 = dma.hbm_to_vmem [thread:$0]  %s1, 128, %s156, [#allocation6]
        $region16: #{tpu_custom_call.1} parent=11 // pred_fallthru
          _
        // Predicated region
        $region17: #{tpu_custom_call.1} parent=11 // pred_check
          %p159 = pneg %p86
        $region18: #{tpu_custom_call.1} parent=11 // pred_check_branch
          %161 = sbr.rel (%p159) target = $region20
        $region19: #{tpu_custom_call.1} parent=11 // pred_region
          %s163 = ssub.s32 1024, 1024
          %164 = vsyncadd [#allocation6], %s163
          %s165 = sshll.u32 [#allocation7], 4
          %s166 = int_to_ptr.vmem [resolvable:$true] %s165
          %171 = dma.hbm_to_vmem [thread:$0]  %s2, 1024, %s166, [#allocation6], 64, 64, 4
        $region20: #{tpu_custom_call.1} parent=11 // pred_fallthru
          _
        // Predicated region
        $region21: #{tpu_custom_call.1} parent=11 // pred_check
          %p172 = pneg %p107
        $region22: #{tpu_custom_call.1} parent=11 // pred_check_branch
          %174 = sbr.rel (%p172) target = $region24
        $region23: #{tpu_custom_call.1} parent=11 // pred_region
          %s176 = ssub.s32 1024, 1024
          %177 = vsyncadd [#allocation9], %s176
          %s178 = sshll.u32 [#allocation8], 4
          %s179 = int_to_ptr.vmem [resolvable:$true] %s178
          %184 = dma.hbm_to_vmem [thread:$0]  %s3, 1024, %s179, [#allocation9], 64, 64, 4
        $region24: #{tpu_custom_call.1} parent=11 // pred_fallthru
          _
      $region12: #{tpu_custom_call.1} parent=5 // pred_fallthru
        _
      %p185 = scmp.lt.s32.totalorder %s18, 2
      // Predicated region
      $region25: #{tpu_custom_call.1} parent=5 // pred_check
        %p186 = pneg %p185
      $region26: #{tpu_custom_call.1} parent=5 // pred_check_branch
        %188 = sbr.rel (%p186) target = $region28
      $region27: #{tpu_custom_call.1} parent=5 // pred_region
        // Predicated region
        $region29: #{tpu_custom_call.1} parent=27 // pred_check
          %p189 = pneg %p38
        $region30: #{tpu_custom_call.1} parent=27 // pred_check_branch
          %191 = sbr.rel (%p189) target = $region32
        $region31: #{tpu_custom_call.1} parent=27 // pred_region
          %s192 = sand.u32 %s28, 1
          %s193 = scalar_lea.sflag [#allocation3], %s192
          %s194 = sand.u32 %s28, 1
          %s195 = smul.addr %s194, 32
          %s196 = scalar_lea.vmem [#allocation2], %s195
          %s197 = smul.u32 4, %s18
          %s199 = ssub.s32 512, 512
          %200 = vsyncadd %s193, %s199
          %s201 = smul.addr %s197, 128
          %s202 = scalar_lea.hbm %s0, %s201
          %s203 = sshll.u32 %s196, 4
          %s204 = int_to_ptr.vmem [resolvable:$true] %s203
          %209 = dma.hbm_to_vmem [thread:$0]  %s202, 512, %s204, %s193, 128, 128, 8
        $region32: #{tpu_custom_call.1} parent=27 // pred_fallthru
          _
      $region28: #{tpu_custom_call.1} parent=5 // pred_fallthru
        _
      %p210 = scmp.le.s32.totalorder 1, %s18
      %p211 = scmp.lt.s32.totalorder %s18, 3
      %p212 = pnand %p210, %p211
      %p213 = pneg %p212
      // Predicated region
      $region33: #{tpu_custom_call.1} parent=5 // pred_check
        _
      $region34: #{tpu_custom_call.1} parent=5 // pred_check_branch
        %215 = sbr.rel (%p212) target = $region36
      $region35: #{tpu_custom_call.1} parent=5 // pred_region
        %s216 = ssub.s32 %s18, 1
        %s217 = sand.u32 %s31, 1
        %s218 = scalar_lea.sflag [#allocation3], %s217
        %s219 = sand.u32 %s31, 1
        %s220 = smul.addr %s219, 32
        %s221 = scalar_lea.vmem [#allocation2], %s220
        // Predicated region
        $region37: #{tpu_custom_call.1} parent=35 // pred_check
          %p222 = pneg %p44
        $region38: #{tpu_custom_call.1} parent=35 // pred_check_branch
          %224 = sbr.rel (%p222) target = $region40
        $region39: #{tpu_custom_call.1} parent=35 // pred_region
          %225 = dma.done %s218, 512
        $region40: #{tpu_custom_call.1} parent=35 // pred_fallthru
          _
        // Predicated region
        $region41: #{tpu_custom_call.1} parent=35 // pred_check
          %p226 = pneg %p65
        $region42: #{tpu_custom_call.1} parent=35 // pred_check_branch
          %228 = sbr.rel (%p226) target = $region44
        $region43: #{tpu_custom_call.1} parent=35 // pred_region
          %229 = dma.done [#allocation6], 128
        $region44: #{tpu_custom_call.1} parent=35 // pred_fallthru
          _
        // Predicated region
        $region45: #{tpu_custom_call.1} parent=35 // pred_check
          %p230 = pneg %p86
        $region46: #{tpu_custom_call.1} parent=35 // pred_check_branch
          %232 = sbr.rel (%p230) target = $region48
        $region47: #{tpu_custom_call.1} parent=35 // pred_region
          %233 = dma.done [#allocation6], 1024
        $region48: #{tpu_custom_call.1} parent=35 // pred_fallthru
          _
        // Predicated region
        $region49: #{tpu_custom_call.1} parent=35 // pred_check
          %p234 = pneg %p107
        $region50: #{tpu_custom_call.1} parent=35 // pred_check_branch
          %236 = sbr.rel (%p234) target = $region52
        $region51: #{tpu_custom_call.1} parent=35 // pred_region
          %237 = dma.done [#allocation9], 1024
        $region52: #{tpu_custom_call.1} parent=35 // pred_fallthru
          _
        %s238 = sand.u32 %s31, 1
        %s239 = scalar_lea.sflag [#allocation3], %s238
        %s240 = sand.u32 %s31, 1
        %s241 = smul.addr %s240, 32
        %s242 = scalar_lea.vmem [#allocation2], %s241
        %p243 = pneg %p44
        %p244 = pneg %p41
        %p245 = pneg %p65
        %p246 = pneg %p62
        %p247 = pneg %p86
        %p248 = pneg %p83
        %p249 = pneg %p107
        %p250 = pneg %p104
        %p251 = pneg %p133
        %p252 = pneg %p130
        %s253 = sand.u32 %s120, 1
        %s254 = scalar_lea.sflag [#allocation4], %s253
        %s255 = sand.u32 %s120, 1
        %s256 = smul.addr %s255, 32
        %s257 = scalar_lea.vmem [#allocation10], %s256
        %s258 = smul.u32 4, %s23
        %s259 = smul.u32 4, %s23
        %v261 = vld [vmem:[%s221] sm:$0xff]
        %v262 = vld [vmem:[%s221 + $0x8] sm:$0xff]
        %v263 = vld [vmem:[%s221 + $0x10] sm:$0xff]
        %v264 = vld [vmem:[%s221 + $0x18] sm:$0xff]
        %v265 = vld [vmem:[#allocation5] sm:$0x1]
        %v266 = vld [vmem:[#allocation5 + $0x1] sm:$0x1]
        %v267 = vld [vmem:[#allocation5 + $0x2] sm:$0x1]
        %v268 = vld [vmem:[#allocation5 + $0x3] sm:$0x1]
        %v269 = vld [vmem:[#allocation5 + $0x4] sm:$0x1]
        %v270 = vlaneseq
        %v271 = vshrl.u32 %v270, 7
        %v272 = vsub.s32 0, %v271
        %v273 = vrot.slane %v265, %v272
        %v274 = vmul.f32 %v261, %v273
        %v275 = vmul.f32 %v262, %v273
        %v276 = vmul.f32 %v263, %v273
        %v277 = vmul.f32 %v264, %v273
        %v278 = vlaneseq
        %v279 = vshrl.u32 %v278, 7
        %v280 = vsub.s32 0, %v279
        %v281 = vrot.slane %v266, %v280
        %v282 = vadd.f32 %v274, %v281
        %v283 = vadd.f32 %v275, %v281
        %v284 = vadd.f32 %v276, %v281
        %v285 = vadd.f32 %v277, %v281
        %v286 = vmax.f32 %v282, 0.0
        %v287 = vmax.f32 %v283, 0.0
        %v288 = vmax.f32 %v284, 0.0
        %v289 = vmax.f32 %v285, 0.0
        %v290 = vpack.c.bf16 %v287, %v286
        %v291 = vpack.c.bf16 %v289, %v288
        %v292 = vld [vmem:[#allocation7] sm:$0xf]
        %v293 = vld [vmem:[#allocation7 + $0x4] sm:$0xf]
        %v294 = vld [vmem:[#allocation7 + $0x8] sm:$0xf]
        %v295 = vld [vmem:[#allocation7 + $0xc] sm:$0xf]
        %v296 = vld [vmem:[#allocation7 + $0x10] sm:$0xf]
        %v297 = vld [vmem:[#allocation7 + $0x14] sm:$0xf]
        %v298 = vld [vmem:[#allocation7 + $0x18] sm:$0xf]
        %v299 = vld [vmem:[#allocation7 + $0x1c] sm:$0xf]
        %v300 = vld [vmem:[#allocation7 + $0x20] sm:$0xf]
        %v301 = vld [vmem:[#allocation7 + $0x24] sm:$0xf]
        %v302 = vld [vmem:[#allocation7 + $0x28] sm:$0xf]
        %v303 = vld [vmem:[#allocation7 + $0x2c] sm:$0xf]
        %v304 = vld [vmem:[#allocation7 + $0x30] sm:$0xf]
        %v305 = vld [vmem:[#allocation7 + $0x34] sm:$0xf]
        %v306 = vld [vmem:[#allocation7 + $0x38] sm:$0xf]
        %v307 = vld [vmem:[#allocation7 + $0x3c] sm:$0xf]
        %v324 = vunpack.c.l.b16 %v292
        %v325 = vunpack.c.l.b16 %v293
        %v326 = vunpack.c.l.b16 %v294
        %v327 = vunpack.c.l.b16 %v295
        %v328 = vunpack.c.l.b16 %v296
        %v329 = vunpack.c.l.b16 %v297
        %v330 = vunpack.c.l.b16 %v298
        %v331 = vunpack.c.l.b16 %v299
        %v332 = vunpack.c.l.b16 %v300
        %v333 = vunpack.c.l.b16 %v301
        %v334 = vunpack.c.l.b16 %v302
        %v335 = vunpack.c.l.b16 %v303
        %v336 = vunpack.c.l.b16 %v304
        %v337 = vunpack.c.l.b16 %v305
        %v338 = vunpack.c.l.b16 %v306
        %v339 = vunpack.c.l.b16 %v307
        %v340 = vpack.c.b16 %v325, %v324
        %v341 = vpack.c.b16 %v327, %v326
        %v342 = vpack.c.b16 %v329, %v328
        %v343 = vpack.c.b16 %v331, %v330
        %v344 = vpack.c.b16 %v333, %v332
        %v345 = vpack.c.b16 %v335, %v334
        %v346 = vpack.c.b16 %v337, %v336
        %v347 = vpack.c.b16 %v339, %v338
        %356 = vmatprep.subr.bf16.mxu0 0
        %357 = vmatpush1.bf16.msra.mxu0 %v347
        %358 = vmatprep.subr.bf16.mxu0 0
        %359 = vmatpush1.bf16.msra.mxu0 %v346
        %360 = vmatprep.subr.bf16.mxu0 0
        %361 = vmatpush1.bf16.msra.mxu0 %v345
        %362 = vmatprep.subr.bf16.mxu0 0
        %363 = vmatpush1.bf16.msra.mxu0 %v344
        %364 = vmatprep.subr.bf16.mxu0 0
        %365 = vmatpush1.bf16.msra.mxu0 %v343
        %366 = vmatprep.subr.bf16.mxu0 0
        %367 = vmatpush1.bf16.msra.mxu0 %v342
        %368 = vmatprep.subr.bf16.mxu0 0
        %369 = vmatpush1.bf16.msra.mxu0 %v341
        %370 = vmatprep.subr.bf16.mxu0 0
        %371 = vmatpush1.bf16.msra.mxu0 %v340
        %372 = vmatprep.subr.bf16.mxu0 0
        %373 = vmatpush2.bf16.msra.mxu0 0
        %374 = vmatprep.subr.bf16.mxu0 0
        %375 = vmatpush2.bf16.msra.mxu0 0
        %376 = vmatprep.subr.bf16.mxu0 0
        %377 = vmatpush2.bf16.msra.mxu0 0
        %378 = vmatprep.subr.bf16.mxu0 0
        %379 = vmatpush2.bf16.msra.mxu0 0
        %380 = vmatprep.subr.bf16.mxu0 0
        %381 = vmatpush2.bf16.msra.mxu0 0
        %382 = vmatprep.subr.bf16.mxu0 0
        %383 = vmatpush2.bf16.msra.mxu0 0
        %384 = vmatprep.subr.bf16.mxu0 0
        %385 = vmatpush2.bf16.msra.mxu0 0
        %386 = vmatprep.subr.bf16.mxu0 0
        %387 = vmatpush2.bf16.msra.mxu0 0
        %388 = vmatprep.mubr.bf16.mxu0 0
        %389 = vmatmul.mubr.bf16.gmra.mxu0 %v290
        %v390 = vpop.f32.mrf.mxu0
        %v391 = vadd.f32 0.0, %v390
        %v392 = vpop.f32.mrf.mxu0
        %v393 = vpop.f32.mrf.mxu0
        %v394 = vadd.f32 0.0, %v393
        %v395 = vpop.f32.mrf.mxu0
        %396 = vmatprep.mubr.bf16.mxu0 0
        %397 = vmatmul.mubr.bf16.gmra.mxu0 %v291
        %v398 = vpop.f32.mrf.mxu0
        %v399 = vadd.f32 0.0, %v398
        %v400 = vpop.f32.mrf.mxu0
        %v401 = vpop.f32.mrf.mxu0
        %v402 = vadd.f32 0.0, %v401
        %v403 = vpop.f32.mrf.mxu0
        %404 = vdwg.mxu0
        %v405 = vlaneseq
        %v406 = vshrl.u32 %v405, 7
        %v407 = vsub.s32 0, %v406
        %v408 = vrot.slane %v267, %v407
        %v409 = vmul.f32 %v391, %v408
        %v410 = vmul.f32 %v394, %v408
        %v411 = vmul.f32 %v399, %v408
        %v412 = vmul.f32 %v402, %v408
        %v413 = vlaneseq
        %v414 = vshrl.u32 %v413, 7
        %v415 = vsub.s32 0, %v414
        %v416 = vrot.slane %v268, %v415
        %v417 = vadd.f32 %v409, %v416
        %v418 = vadd.f32 %v410, %v416
        %v419 = vadd.f32 %v411, %v416
        %v420 = vadd.f32 %v412, %v416
        %v421 = vmax.f32 %v417, 0.0
        %v422 = vmax.f32 %v418, 0.0
        %v423 = vmax.f32 %v419, 0.0
        %v424 = vmax.f32 %v420, 0.0
        %v425 = vpack.c.bf16 %v422, %v421
        %v426 = vpack.c.bf16 %v424, %v423
        %v427 = vld [vmem:[#allocation8] sm:$0xf]
        %v428 = vld [vmem:[#allocation8 + $0x4] sm:$0xf]
        %v429 = vld [vmem:[#allocation8 + $0x8] sm:$0xf]
        %v430 = vld [vmem:[#allocation8 + $0xc] sm:$0xf]
        %v431 = vld [vmem:[#allocation8 + $0x10] sm:$0xf]
        %v432 = vld [vmem:[#allocation8 + $0x14] sm:$0xf]
        %v433 = vld [vmem:[#allocation8 + $0x18] sm:$0xf]
        %v434 = vld [vmem:[#allocation8 + $0x1c] sm:$0xf]
        %v435 = vld [vmem:[#allocation8 + $0x20] sm:$0xf]
        %v436 = vld [vmem:[#allocation8 + $0x24] sm:$0xf]
        %v437 = vld [vmem:[#allocation8 + $0x28] sm:$0xf]
        %v438 = vld [vmem:[#allocation8 + $0x2c] sm:$0xf]
        %v439 = vld [vmem:[#allocation8 + $0x30] sm:$0xf]
        %v440 = vld [vmem:[#allocation8 + $0x34] sm:$0xf]
        %v441 = vld [vmem:[#allocation8 + $0x38] sm:$0xf]
        %v442 = vld [vmem:[#allocation8 + $0x3c] sm:$0xf]
        %v443 = vlaneseq
        %v444 = vshrl.u32 %v443, 7
        %v445 = vsub.s32 0, %v444
        %v446 = vrot.slane %v269, %v445
        %v463 = vunpack.c.l.b16 %v427
        %v464 = vunpack.c.l.b16 %v428
        %v465 = vunpack.c.l.b16 %v429
        %v466 = vunpack.c.l.b16 %v430
        %v467 = vunpack.c.l.b16 %v431
        %v468 = vunpack.c.l.b16 %v432
        %v469 = vunpack.c.l.b16 %v433
        %v470 = vunpack.c.l.b16 %v434
        %v471 = vunpack.c.l.b16 %v435
        %v472 = vunpack.c.l.b16 %v436
        %v473 = vunpack.c.l.b16 %v437
        %v474 = vunpack.c.l.b16 %v438
        %v475 = vunpack.c.l.b16 %v439
        %v476 = vunpack.c.l.b16 %v440
        %v477 = vunpack.c.l.b16 %v441
        %v478 = vunpack.c.l.b16 %v442
        %v479 = vpack.c.b16 %v464, %v463
        %v480 = vpack.c.b16 %v466, %v465
        %v481 = vpack.c.b16 %v468, %v467
        %v482 = vpack.c.b16 %v470, %v469
        %v483 = vpack.c.b16 %v472, %v471
        %v484 = vpack.c.b16 %v474, %v473
        %v485 = vpack.c.b16 %v476, %v475
        %v486 = vpack.c.b16 %v478, %v477
        %495 = vmatprep.subr.bf16.mxu0 0
        %496 = vmatpush1.bf16.msra.mxu0 %v486
        %497 = vmatprep.subr.bf16.mxu0 0
        %498 = vmatpush1.bf16.msra.mxu0 %v485
        %499 = vmatprep.subr.bf16.mxu0 0
        %500 = vmatpush1.bf16.msra.mxu0 %v484
        %501 = vmatprep.subr.bf16.mxu0 0
        %502 = vmatpush1.bf16.msra.mxu0 %v483
        %503 = vmatprep.subr.bf16.mxu0 0
        %504 = vmatpush1.bf16.msra.mxu0 %v482
        %505 = vmatprep.subr.bf16.mxu0 0
        %506 = vmatpush1.bf16.msra.mxu0 %v481
        %507 = vmatprep.subr.bf16.mxu0 0
        %508 = vmatpush1.bf16.msra.mxu0 %v480
        %509 = vmatprep.subr.bf16.mxu0 0
        %510 = vmatpush1.bf16.msra.mxu0 %v479
        %511 = vmatprep.subr.bf16.mxu0 0
        %512 = vmatpush2.bf16.msra.mxu0 0
        %513 = vmatprep.subr.bf16.mxu0 0
        %514 = vmatpush2.bf16.msra.mxu0 0
        %515 = vmatprep.subr.bf16.mxu0 0
        %516 = vmatpush2.bf16.msra.mxu0 0
        %517 = vmatprep.subr.bf16.mxu0 0
        %518 = vmatpush2.bf16.msra.mxu0 0
        %519 = vmatprep.subr.bf16.mxu0 0
        %520 = vmatpush2.bf16.msra.mxu0 0
        %521 = vmatprep.subr.bf16.mxu0 0
        %522 = vmatpush2.bf16.msra.mxu0 0
        %523 = vmatprep.subr.bf16.mxu0 0
        %524 = vmatpush2.bf16.msra.mxu0 0
        %525 = vmatprep.subr.bf16.mxu0 0
        %526 = vmatpush2.bf16.msra.mxu0 0
        %527 = vmatprep.mubr.bf16.mxu0 0
        %528 = vmatmul.mubr.bf16.gmra.mxu0 %v425
        %v529 = vpop.f32.mrf.mxu0
        %v530 = vadd.f32 %v446, %v529
        %v531 = vpop.f32.mrf.mxu0
        %v532 = vpop.f32.mrf.mxu0
        %v533 = vadd.f32 %v446, %v532
        %v534 = vpop.f32.mrf.mxu0
        %535 = vmatprep.mubr.bf16.mxu0 0
        %536 = vmatmul.mubr.bf16.gmra.mxu0 %v426
        %v537 = vpop.f32.mrf.mxu0
        %v538 = vadd.f32 %v446, %v537
        %v539 = vpop.f32.mrf.mxu0
        %v540 = vpop.f32.mrf.mxu0
        %v541 = vadd.f32 %v446, %v540
        %v542 = vpop.f32.mrf.mxu0
        %543 = vdwg.mxu0
        %v544 = vadd.f32 %v530, %v261
        %v545 = vadd.f32 %v533, %v262
        %v546 = vadd.f32 %v538, %v263
        %v547 = vadd.f32 %v541, %v264
        %548 = vst [vmem:[%s257] sm:$0xff] %v544
        %549 = vst [vmem:[%s257 + $0x8] sm:$0xff] %v545
        %550 = vst [vmem:[%s257 + $0x10] sm:$0xff] %v546
        %551 = vst [vmem:[%s257 + $0x18] sm:$0xff] %v547
        %s552 = sand.u32 %s120, 1
        %s553 = scalar_lea.sflag [#allocation4], %s552
        %s554 = sand.u32 %s120, 1
        %s555 = smul.addr %s554, 32
        %s556 = scalar_lea.vmem [#allocation10], %s555
        // Predicated region
        $region53: #{tpu_custom_call.1} parent=35 // pred_check
          %p557 = pneg %p130
        $region54: #{tpu_custom_call.1} parent=35 // pred_check_branch
          %559 = sbr.rel (%p557) target = $region56
        $region55: #{tpu_custom_call.1} parent=35 // pred_region
          %s560 = smul.u32 4, %s23
          %s562 = ssub.s32 512, 512
          %563 = vsyncadd %s553, %s562
          %s564 = smul.addr %s560, 128
          %s565 = scalar_lea.hbm %s4, %s564
          %s566 = sshll.u32 %s556, 4
          %s567 = int_to_ptr.vmem [resolvable:$true] %s566
          %572 = dma.vmem_to_hbm [thread:$0]  %s567, 512, %s565, %s553, 128, 128, 8
        $region56: #{tpu_custom_call.1} parent=35 // pred_fallthru
          _
      $region36: #{tpu_custom_call.1} parent=5 // pred_fallthru
        _
      %p573 = scmp.le.s32.totalorder 2, %s18
      // Predicated region
      $region57: #{tpu_custom_call.1} parent=5 // pred_check
        %p574 = pneg %p573
      $region58: #{tpu_custom_call.1} parent=5 // pred_check_branch
        %576 = sbr.rel (%p574) target = $region60
      $region59: #{tpu_custom_call.1} parent=5 // pred_region
        %s577 = ssub.s32 %s18, 2
        // Predicated region
        $region61: #{tpu_custom_call.1} parent=59 // pred_check
          %p578 = pneg %p136
        $region62: #{tpu_custom_call.1} parent=59 // pred_check_branch
          %580 = sbr.rel (%p578) target = $region64
        $region63: #{tpu_custom_call.1} parent=59 // pred_region
          %s581 = sand.u32 %s121, 1
          %s582 = scalar_lea.sflag [#allocation4], %s581
          %s583 = sand.u32 %s121, 1
          %s584 = smul.addr %s583, 32
          %s585 = scalar_lea.vmem [#allocation10], %s584
          %586 = dma.done %s582, 512
        $region64: #{tpu_custom_call.1} parent=59 // pred_fallthru
          _
      $region60: #{tpu_custom_call.1} parent=5 // pred_fallthru
        _
    $region6: #{tpu_custom_call.1} parent=1 // loop_footer
      %s22 = sadd.s32 1, %s18
    $region7: #{tpu_custom_call.1} parent=1 // loop_footer_branch
      %17 = sbr.rel target = $region3
    $region8: #{tpu_custom_call.1} parent=1 // loop_exit
      _
    %587 = vsyncpa [#allocation3], 1
    %s588 = scalar_lea.sflag [#allocation3], 1
    %589 = vsyncpa %s588, 1
    %590 = vsyncpa [#allocation6], 1
    %591 = vsyncpa [#allocation9], 1
    %592 = vsyncpa [#allocation4], 1
    %s593 = scalar_lea.sflag [#allocation4], 1
    %594 = vsyncpa %s593, 1

</llo_original>
